<compile_context>
chip_gen: v7x
topology: tpu7x:2x2x1
jax: 0.10.0
libtpu: 0.0.40
codegen_flags: <defaults>
</compile_context>

<pallas_src>
import jax
import jax.numpy as jnp
from jax.experimental import pallas as pl
from jax.experimental.pallas import tpu as pltpu


def _ppp_union_kernel(src_ref, w_ref, b_ref, out_ref):
    # src_ref: (TN, D) f32/bf16, w_ref: (D, P), b_ref: (1, P) f32,
    # out_ref: (1, 1, TN) f32  (lane-dense output row)
    tn = src_ref.shape[0]

    # per-ppp log probs for this tile: outs[:, i] = src @ w_i + b_i
    outs = jnp.dot(src_ref[...], w_ref[...],
                   preferred_element_type=jnp.float32) + b_ref[...]

    # numerically-stable logsumexp over the ppp axis (dim 1), matching
    # torch.logsumexp(torch.cat(outs, 1), 1).  Guard the all -inf case:
    # torch returns -inf there; naive (outs - m) would produce NaN.
    m = jnp.max(outs, axis=-1, keepdims=True)            # (TN, 1)
    m_safe = jnp.where(m == -jnp.inf, 0.0, m)
    s = jnp.sum(jnp.exp(outs - m_safe), axis=-1, keepdims=True)
    lse = m_safe + jnp.log(s)                             # (TN, 1); -inf rows -> -inf

    # lane-dense store: (TN, 1) column -> (1, 1, TN) row (tiny VMEM relayout,
    # removes TN/8 masked partial stores per step).
    out_ref[...] = lse.reshape(1, 1, tn)


def _choose_tile_n(n, requested):
    """Pick a tile size: big enough to sit near the HBM roofline, small enough
    to keep >= ~8 grid steps (v7x megacore + pipeline overlap), multiple of 16
    (bf16 sublane packing), and not absurdly larger than N."""
    t = max(128, (int(requested) // 128) * 128)
    while t > 128 and pl.cdiv(n, t) < 8:
        t -= 128
    # don't pad tiny inputs up to a huge tile
    t = min(t, pl.cdiv(n, 16) * 16)
    return max(16, t)


def poisson_point_union_forward(src, w, b, *, tile_n=1024):
    """src: (N, D) float32 or bfloat16, w: (D, P), b: (P,) -> (N,) float32."""
    N, D = src.shape
    P = w.shape[1]

    tn = _choose_tile_n(N, tile_n)
    n_tiles = pl.cdiv(N, tn)
    n_pad = n_tiles * tn
    if n_pad != N:
        # ragged N: pad rows (padded rows compute garbage and are sliced off)
        src = jnp.pad(src, ((0, n_pad - N), (0, 0)))

    # keep src in its native dtype (bf16 halves HBM bytes on this mem-bound
    # kernel); cast the tiny weights to match, bias stays f32 for the add.
    w = w.astype(src.dtype)
    b2 = b.reshape(1, P).astype(jnp.float32)

    out = pl.pallas_call(
        _ppp_union_kernel,
        out_shape=jax.ShapeDtypeStruct((n_tiles, 1, tn), jnp.float32),
        grid_spec=pltpu.PrefetchScalarGridSpec(
            num_scalar_prefetch=0,
            grid=(n_tiles,),
            in_specs=[
                pl.BlockSpec((tn, D), lambda i: (i, 0)),
                # constant index maps -> W and b stay VMEM-resident across steps
                pl.BlockSpec((D, P), lambda i: (0, 0)),
                pl.BlockSpec((1, P), lambda i: (0, 0)),
            ],
            out_specs=pl.BlockSpec((1, 1, tn), lambda i: (i, 0, 0)),
        ),
        compiler_params=pltpu.CompilerParams(
            dimension_semantics=("parallel",)),
    )(src, w, b2)

    return out.reshape(n_pad)[:N]


def poisson_point_union_integrate(b, image_sizes, num_classes):
    # Union integral = sum of per-ppp integrals. Synthetic sub-PPP integral:
    # exp(bias_i) * H * W * num_classes (constant-intensity PPP over the image).
    # TODO(synk): real sub-PPP integrate() depends on the concrete PPP classes
    # added via add_ppp(); only the union-level summation is specified here.
    h, w_ = image_sizes
    return jnp.sum(jnp.exp(b)) * h * w_ * num_classes


if __name__ == "__main__":
    key = jax.random.PRNGKey(0)
    k_src, k_w, k_b = jax.random.split(key, 3)

    # small shapes; ragged N exercises the cdiv grid + padding path
    N, D, P = 300, 32, 3
    src = jax.random.normal(k_src, (N, D), dtype=jnp.float32)
    w = 0.1 * jax.random.normal(k_w, (D, P), dtype=jnp.float32)
    b = 0.05 * jax.random.normal(k_b, (P,), dtype=jnp.float32)

    # float32 path
    out = jax.block_until_ready(poisson_point_union_forward(src, w, b))
    logits = jnp.dot(src, w, precision=jax.lax.Precision.HIGHEST) + b[None, :]
    ref = jax.scipy.special.logsumexp(logits, axis=1)
    assert out.shape == (N,)
    assert jnp.allclose(out, ref, atol=1e-4, rtol=1e-4), \
        float(jnp.max(jnp.abs(out - ref)))

    # bf16 src path (halved HBM traffic; f32 accumulation on the MXU)
    src_bf = src.astype(jnp.bfloat16)
    out_bf = jax.block_until_ready(poisson_point_union_forward(src_bf, w, b))
    logits_bf = jnp.dot(src_bf.astype(jnp.float32),
                        w.astype(jnp.bfloat16).astype(jnp.float32),
                        precision=jax.lax.Precision.HIGHEST) + b[None, :]
    ref_bf = jax.scipy.special.logsumexp(logits_bf, axis=1)
    assert jnp.allclose(out_bf, ref_bf, atol=1e-2, rtol=1e-2), \
        float(jnp.max(jnp.abs(out_bf - ref_bf)))

    # exercise the integrate branch as well (plain JAX glue)
    _ = jax.block_until_ready(
        poisson_point_union_integrate(b, image_sizes=(16.0, 16.0),
                                      num_classes=4))

    print("KERNEL_OK")
</pallas_src>

<mosaic_0001>
module attributes {stable_mosaic.version = 11 : i64} {
  func.func @_ppp_union_kernel(%arg0: i32, %arg1: memref<128x32xf32, #tpu.memory_space<vmem>>, %arg2: memref<32x3xf32, #tpu.memory_space<vmem>>, %arg3: memref<1x3xf32, #tpu.memory_space<vmem>>, %arg4: memref<1x1x128xf32, #tpu.memory_space<vmem>>) attributes {dimension_semantics = [#tpu.dimension_semantics<parallel>], iteration_bounds = array<i64: 3>, scalar_prefetch = 0 : i64, scratch_operands = 0 : i64, tpu.core_type = #tpu.core_type<tc>, window_params = [{transform_indices = @transform_0, window_bounds = array<i64: 128, 32>}, {pipeline_mode = #tpu.pipeline_mode<synchronous>, transform_indices = @transform_1, window_bounds = array<i64: 32, 3>}, {pipeline_mode = #tpu.pipeline_mode<synchronous>, transform_indices = @transform_2, window_bounds = array<i64: 1, 3>}, {transform_indices = @transform_3, window_bounds = array<i64: 1, 1, 128>}]} {
    %c0 = arith.constant 0 : index
    %c0_0 = arith.constant 0 : index
    %0 = vector.load %arg1[%c0, %c0_0] : memref<128x32xf32, #tpu.memory_space<vmem>>, vector<128x32xf32>
    %c0_1 = arith.constant 0 : index
    %c0_2 = arith.constant 0 : index
    %1 = vector.load %arg2[%c0_1, %c0_2] : memref<32x3xf32, #tpu.memory_space<vmem>>, vector<32x3xf32>
    %cst = arith.constant dense<0.000000e+00> : vector<128x3xf32>
    %2 = tpu.matmul %0, %1, %cst {dimension_numbers = #tpu.dot_dimension_numbers<[1], [0], [0], [1], [0, 0, 1, 1], [], []>} : vector<128x32xf32>, vector<32x3xf32>, vector<128x3xf32> -> vector<128x3xf32>
    %c0_3 = arith.constant 0 : index
    %c0_4 = arith.constant 0 : index
    %3 = vector.load %arg3[%c0_3, %c0_4] : memref<1x3xf32, #tpu.memory_space<vmem>>, vector<1x3xf32>
    %4 = vector.broadcast %3 : vector<1x3xf32> to vector<128x3xf32>
    %5 = arith.addf %2, %4 : vector<128x3xf32>
    %cst_5 = arith.constant dense<0xFF800000> : vector<128xf32>
    %6 = vector.multi_reduction <maximumf>, %5, %cst_5 [1] : vector<128x3xf32> to vector<128xf32>
    %7 = vector.shape_cast %6 : vector<128xf32> to vector<128x1xf32>
    %cst_6 = arith.constant 0xFF800000 : f32
    %8 = vector.broadcast %cst_6 : f32 to vector<128x1xf32>
    %9 = arith.cmpf oeq, %7, %8 : vector<128x1xf32>
    %cst_7 = arith.constant 0.000000e+00 : f32
    %10 = vector.broadcast %cst_7 : f32 to vector<128x1xf32>
    %11 = arith.select %9, %10, %7 : vector<128x1xi1>, vector<128x1xf32>
    %12 = vector.broadcast %11 : vector<128x1xf32> to vector<128x3xf32>
    %13 = arith.subf %5, %12 : vector<128x3xf32>
    %14 = math.exp %13 : vector<128x3xf32>
    %cst_8 = arith.constant dense<0.000000e+00> : vector<128xf32>
    %15 = vector.multi_reduction <add>, %14, %cst_8 [1] : vector<128x3xf32> to vector<128xf32>
    %16 = vector.shape_cast %15 : vector<128xf32> to vector<128x1xf32>
    %17 = math.log %16 : vector<128x1xf32>
    %18 = arith.addf %11, %17 : vector<128x1xf32>
    %19 = vector.shape_cast %18 : vector<128x1xf32> to vector<1x1x128xf32>
    %c0_9 = arith.constant 0 : index
    %c0_10 = arith.constant 0 : index
    %c0_11 = arith.constant 0 : index
    %20 = vector.load %arg4[%c0_9, %c0_10, %c0_11] : memref<1x1x128xf32, #tpu.memory_space<vmem>>, vector<1x1x128xf32>
    tpu.vector_store %arg4[%c0_9, %c0_10, %c0_11], %19 {strides = array<i32>} : memref<1x1x128xf32, #tpu.memory_space<vmem>>, vector<1x1x128xf32>,
    return
  }
  func.func @transform_0(%arg0: i32) -> (i32, i32) {
    %c0_i32 = arith.constant 0 : i32
    %c0_i32_0 = arith.constant 0 : i32
    return %arg0, %c0_i32 : i32, i32
  }
  func.func @transform_1(%arg0: i32) -> (i32, i32) {
    %c0_i32 = arith.constant 0 : i32
    %c0_i32_0 = arith.constant 0 : i32
    %c0_i32_1 = arith.constant 0 : i32
    return %c0_i32, %c0_i32_0 : i32, i32
  }
  func.func @transform_2(%arg0: i32) -> (i32, i32) {
    %c0_i32 = arith.constant 0 : i32
    %c0_i32_0 = arith.constant 0 : i32
    %c0_i32_1 = arith.constant 0 : i32
    return %c0_i32, %c0_i32_0 : i32, i32
  }
  func.func @transform_3(%arg0: i32) -> (i32, i32, i32) {
    %c0_i32 = arith.constant 0 : i32
    %c0_i32_0 = arith.constant 0 : i32
    %c0_i32_1 = arith.constant 0 : i32
    return %arg0, %c0_i32, %c0_i32_0 : i32, i32, i32
  }
}

</mosaic_0001>

<llo_original>
// kernel: tpu_custom_call.1
$region0: #{tpu_custom_call.1}
  #allocation0 [shape = 'u32[]', space=smem, size = 0x4, offset = 0x4, fixed_abs, tag = 'smem constant byte address 0x4 - core index']
  #allocation1 [shape = 'u32[144,128]{1,0:T(1,128)}', space=vmem, size = 0x12000, scoped, tag = 'internal scratch']
  %s0 = inlined_call_operand.vmem [shape: f32[384,32], index: 0, kind: input, shape index: {}]
  %s1 = inlined_call_operand.vmem [shape: f32[32,3], index: 1, kind: input, shape index: {}]
  %s2 = inlined_call_operand.vmem [shape: f32[1,3], index: 2, kind: input, shape index: {}]
  %s3 = inlined_call_operand.hbm [shape: f32[3,1,128], index: 3, kind: output, shape index: {}]
  %s4 = sld [smem:[#allocation0]]
  $region45: #{tpu_custom_call.1} parent=0
    _
  %s6 = ssub.s32 1, %s4
  %s7 = scalar_select 0, %s6, %s4
  $region1: #{tpu_custom_call.1} parent=0
    #allocation2 [shape = 'u8[1024]{0}', space=vmem, size = 0x400, scoped, tag = 'output window, operand 0']
    #allocation3 [shape = 's32[2]{0}', space=sflag, size = 0x8, scoped, tag = 'scoped memory for tpu_custom_call.1']
    %8 = vsyncpa [#allocation3], 0
    %s9 = scalar_lea.sflag [#allocation3], 1
    %10 = vsyncpa %s9, 0
    loop: start=0, step=1, limit=5
    $region2: #{tpu_custom_call.1} parent=1 // loop_pre_header
      _
    $region3: #{tpu_custom_call.1} parent=1 // loop_header
      %s12 = sphi 0, %s16
      %p13 = scmp.ge.s32.totalorder %s12, 5
      %s22 = sphi 0, %s24
      %s25 = sphi 0, %s22
      %s26 = sphi 0, %s25
      %s42 = sphi 0, %s26
      %s46 = sphi 0, %s46
      %s48 = sphi 0, %s46
      %s49 = sphi 0, %s48
      %s63 = sphi 0, %s49
      %s67 = sphi 0, %s67
      %s69 = sphi 0, %s67
      %s70 = sphi 0, %s69
      %s84 = sphi 0, %s70
      %s90 = sphi 0, %s92
      %s93 = sphi 0, %s90
      %s94 = sphi 0, %s93
      %s110 = sphi 0, %s94
    $region4: #{tpu_custom_call.1} parent=1 // loop_header_branch
      %15 = sbr.rel (%p13) target = $region8
    $region5: #{tpu_custom_call.1} parent=1 // loop_body
      %s17 = ssub.s32 %s12, 1
      %s18 = ssub.s32 %s12, 2
      %s19 = sadd.s32 %s12, 1
      %s20 = ssub.s32 %s12, %s19
      %p21 = scmp.eq.s32.totalorder %s20, 0
      %s23 = sadd.s32 %s22, 1
      %s24 = scalar_select %p21, %s22, %s23
      %p27 = pneg %p21
      %p28 = scmp.eq.s32.totalorder %s12, 2
      %p29 = por %p27, %p28
      %p30 = scmp.ne.s32.totalorder %s22, %s25
      %p31 = scmp.eq.s32.totalorder %s12, 0
      %p32 = por %p30, %p31
      %p33 = scmp.ne.s32.totalorder %s22, %s25
      %p34 = scmp.eq.s32.totalorder %s17, 2
      %p35 = por %p33, %p34
      %p36 = scmp.ne.s32.totalorder %s25, %s26
      %p37 = scmp.eq.s32.totalorder %s17, 0
      %p38 = por %p36, %p37
      %p39 = scmp.ne.s32.totalorder %s25, %s26
      %p40 = scmp.eq.s32.totalorder %s18, 2
      %p41 = por %p39, %p40
      %p43 = scmp.ne.s32.totalorder %s26, %s42
      %p44 = scmp.eq.s32.totalorder %s18, 0
      %p45 = por %p43, %p44
      %s47 = sadd.s32 %s46, 1
      %p50 = scmp.eq.s32.totalorder %s12, 2
      %p51 = scmp.ne.s32.totalorder %s46, %s48
      %p52 = scmp.eq.s32.totalorder %s12, 0
      %p53 = por %p51, %p52
      %p54 = scmp.ne.s32.totalorder %s46, %s48
      %p55 = scmp.eq.s32.totalorder %s17, 2
      %p56 = por %p54, %p55
      %p57 = scmp.ne.s32.totalorder %s48, %s49
      %p58 = scmp.eq.s32.totalorder %s17, 0
      %p59 = por %p57, %p58
      %p60 = scmp.ne.s32.totalorder %s48, %s49
      %p61 = scmp.eq.s32.totalorder %s18, 2
      %p62 = por %p60, %p61
      %p64 = scmp.ne.s32.totalorder %s49, %s63
      %p65 = scmp.eq.s32.totalorder %s18, 0
      %p66 = por %p64, %p65
      %s68 = sadd.s32 %s67, 1
      %p71 = scmp.eq.s32.totalorder %s12, 2
      %p72 = scmp.ne.s32.totalorder %s67, %s69
      %p73 = scmp.eq.s32.totalorder %s12, 0
      %p74 = por %p72, %p73
      %p75 = scmp.ne.s32.totalorder %s67, %s69
      %p76 = scmp.eq.s32.totalorder %s17, 2
      %p77 = por %p75, %p76
      %p78 = scmp.ne.s32.totalorder %s69, %s70
      %p79 = scmp.eq.s32.totalorder %s17, 0
      %p80 = por %p78, %p79
      %p81 = scmp.ne.s32.totalorder %s69, %s70
      %p82 = scmp.eq.s32.totalorder %s18, 2
      %p83 = por %p81, %p82
      %p85 = scmp.ne.s32.totalorder %s70, %s84
      %p86 = scmp.eq.s32.totalorder %s18, 0
      %p87 = por %p85, %p86
      %s88 = ssub.s32 %s12, %s19
      %p89 = scmp.eq.s32.totalorder %s88, 0
      %s91 = sadd.s32 %s90, 1
      %s92 = scalar_select %p89, %s90, %s91
      %p95 = pneg %p89
      %p96 = scmp.eq.s32.totalorder %s12, 2
      %p97 = por %p95, %p96
      %p98 = scmp.ne.s32.totalorder %s90, %s93
      %p99 = scmp.eq.s32.totalorder %s12, 0
      %p100 = por %p98, %p99
      %p101 = scmp.ne.s32.totalorder %s90, %s93
      %p102 = scmp.eq.s32.totalorder %s17, 2
      %p103 = por %p101, %p102
      %p104 = scmp.ne.s32.totalorder %s93, %s94
      %p105 = scmp.eq.s32.totalorder %s17, 0
      %p106 = por %p104, %p105
      %p107 = scmp.ne.s32.totalorder %s93, %s94
      %p108 = scmp.eq.s32.totalorder %s18, 2
      %p109 = por %p107, %p108
      %p111 = scmp.ne.s32.totalorder %s94, %s110
      %p112 = scmp.eq.s32.totalorder %s18, 0
      %p113 = por %p111, %p112
      %p114 = scmp.le.s32.totalorder 1, %s12
      %p115 = scmp.lt.s32.totalorder %s12, 4
      %p116 = pnand %p114, %p115
      %p117 = pneg %p116
      // Predicated region
      $region9: #{tpu_custom_call.1} parent=5 // pred_check
        _
      $region10: #{tpu_custom_call.1} parent=5 // pred_check_branch
        %119 = sbr.rel (%p116) target = $region12
      $region11: #{tpu_custom_call.1} parent=5 // pred_region
        %s120 = ssub.s32 %s12, 1
        // Predicated region
        $region13: #{tpu_custom_call.1} parent=11 // pred_check
          %p121 = pneg %p59
        $region14: #{tpu_custom_call.1} parent=11 // pred_check_branch
          %123 = sbr.rel (%p121) target = $region16
        $region15: #{tpu_custom_call.1} parent=11 // pred_region
          _
        $region16: #{tpu_custom_call.1} parent=11 // pred_fallthru
          _
        // Predicated region
        $region17: #{tpu_custom_call.1} parent=11 // pred_check
          %p124 = pneg %p80
        $region18: #{tpu_custom_call.1} parent=11 // pred_check_branch
          %126 = sbr.rel (%p124) target = $region20
        $region19: #{tpu_custom_call.1} parent=11 // pred_region
          _
        $region20: #{tpu_custom_call.1} parent=11 // pred_fallthru
          _
      $region12: #{tpu_custom_call.1} parent=5 // pred_fallthru
        _
      %p127 = scmp.lt.s32.totalorder %s12, 3
      // Predicated region
      $region21: #{tpu_custom_call.1} parent=5 // pred_check
        %p128 = pneg %p127
      $region22: #{tpu_custom_call.1} parent=5 // pred_check_branch
        %130 = sbr.rel (%p128) target = $region24
      $region23: #{tpu_custom_call.1} parent=5 // pred_region
        // Predicated region
        $region25: #{tpu_custom_call.1} parent=23 // pred_check
          %p131 = pneg %p32
        $region26: #{tpu_custom_call.1} parent=23 // pred_check_branch
          %133 = sbr.rel (%p131) target = $region28
        $region27: #{tpu_custom_call.1} parent=23 // pred_region
          %s134 = smul.u32 16, %s12
          %p135 = scmp.lt.s32.totalorder %s134, 47
          %s136 = scalar_select %p135, %s134, 47
          %s137 = smul.addr %s136, 8
          %s138 = scalar_lea.vmem %s0, %s137
          %s139 = smul.u32 16, %s12
        $region28: #{tpu_custom_call.1} parent=23 // pred_fallthru
          _
      $region24: #{tpu_custom_call.1} parent=5 // pred_fallthru
        _
      %p140 = scmp.le.s32.totalorder 1, %s12
      %p141 = scmp.lt.s32.totalorder %s12, 4
      %p142 = pnand %p140, %p141
      %p143 = pneg %p142
      // Predicated region
      $region29: #{tpu_custom_call.1} parent=5 // pred_check
        _
      $region30: #{tpu_custom_call.1} parent=5 // pred_check_branch
        %145 = sbr.rel (%p142) target = $region32
      $region31: #{tpu_custom_call.1} parent=5 // pred_region
        %s146 = ssub.s32 %s12, 1
        %s147 = smul.u32 16, %s17
        %p148 = scmp.lt.s32.totalorder %s147, 47
        %s149 = scalar_select %p148, %s147, 47
        %s150 = smul.addr %s149, 8
        %s151 = scalar_lea.vmem %s0, %s150
        %p152 = pneg %p38
        %p153 = pneg %p35
        %p154 = pneg %p59
        %p155 = pneg %p56
        %p156 = pneg %p80
        %p157 = pneg %p77
        %p158 = pneg %p106
        %p159 = pneg %p103
        %s160 = sand.u32 %s93, 1
        %s161 = scalar_lea.sflag [#allocation3], %s160
        %s162 = sand.u32 %s93, 1
        %s163 = scalar_lea.vmem [#allocation2], %s162
        %s164 = smul.u32 16, %s17
        %p165 = scmp.lt.s32.totalorder %s164, 47
        %s166 = scalar_select %p165, %s164, 47
        %s167 = smul.addr %s166, 8
        %s168 = scalar_lea.vmem %s0, %s167
        %s169 = smul.u32 16, %s17
        %v170 = vld [vmem:[%s168] sm:$0xff]
        %v171 = vld [vmem:[%s168 + $0x8] sm:$0xff]
        %v172 = vld [vmem:[%s168 + $0x10] sm:$0xff]
        %v173 = vld [vmem:[%s168 + $0x18] sm:$0xff]
        %v174 = vld [vmem:[%s168 + $0x20] sm:$0xff]
        %v175 = vld [vmem:[%s168 + $0x28] sm:$0xff]
        %v176 = vld [vmem:[%s168 + $0x30] sm:$0xff]
        %v177 = vld [vmem:[%s168 + $0x38] sm:$0xff]
        %v178 = vld [vmem:[%s168 + $0x40] sm:$0xff]
        %v179 = vld [vmem:[%s168 + $0x48] sm:$0xff]
        %v180 = vld [vmem:[%s168 + $0x50] sm:$0xff]
        %v181 = vld [vmem:[%s168 + $0x58] sm:$0xff]
        %v182 = vld [vmem:[%s168 + $0x60] sm:$0xff]
        %v183 = vld [vmem:[%s168 + $0x68] sm:$0xff]
        %v184 = vld [vmem:[%s168 + $0x70] sm:$0xff]
        %v185 = vld [vmem:[%s168 + $0x78] sm:$0xff]
        %v186 = vld [vmem:[%s1] sm:$0xff]
        %v187 = vld [vmem:[%s1 + $0x8] sm:$0xff]
        %v188 = vld [vmem:[%s1 + $0x10] sm:$0xff]
        %v189 = vld [vmem:[%s1 + $0x18] sm:$0xff]
        %v190 = vld [vmem:[%s2] sm:$0x1]
        %v192 = vlaneseq
        %v193 = vshrl.u32 %v192, 7
        %v194 = vsub.s32 0, %v193
        %v195 = vrot.slane %v190, %v194
        %vm197 = vcmask 261120
        %v199 = vsel %vm197, %v170, 0
        %v202 = vsel %vm197, %v171, 0
        %v205 = vsel %vm197, %v172, 0
        %v208 = vsel %vm197, %v173, 0
        %v211 = vsel %vm197, %v174, 0
        %v214 = vsel %vm197, %v175, 0
        %v217 = vsel %vm197, %v176, 0
        %v220 = vsel %vm197, %v177, 0
        %v223 = vsel %vm197, %v178, 0
        %v226 = vsel %vm197, %v179, 0
        %v229 = vsel %vm197, %v180, 0
        %v232 = vsel %vm197, %v181, 0
        %v235 = vsel %vm197, %v182, 0
        %v238 = vsel %vm197, %v183, 0
        %v241 = vsel %vm197, %v184, 0
        %v244 = vsel %vm197, %v185, 0
        %246 = vmatprep.subr.mxu0 0.0
        %247 = vmatpush1.msra.mxu0 %v186
        %248 = vmatprep.subr.mxu0 0.0
        %249 = vmatpush1.msra.mxu0 %v187
        %250 = vmatprep.subr.mxu0 0.0
        %251 = vmatpush1.msra.mxu0 %v188
        %252 = vmatprep.subr.mxu0 0.0
        %253 = vmatpush1.msra.mxu0 %v189
        %254 = vmatprep.subr.mxu0 0.0
        %255 = vmatpush1.msra.mxu0 0.0
        %256 = vmatprep.subr.mxu0 0.0
        %257 = vmatpush1.msra.mxu0 0.0
        %258 = vmatprep.subr.mxu0 0.0
        %259 = vmatpush1.msra.mxu0 0.0
        %260 = vmatprep.subr.mxu0 0.0
        %261 = vmatpush1.msra.mxu0 0.0
        %262 = vmatprep.subr.mxu0 0.0
        %263 = vmatpush1.msra.mxu0 0.0
        %264 = vmatprep.subr.mxu0 0.0
        %265 = vmatpush1.msra.mxu0 0.0
        %266 = vmatprep.subr.mxu0 0.0
        %267 = vmatpush1.msra.mxu0 0.0
        %268 = vmatprep.subr.mxu0 0.0
        %269 = vmatpush1.msra.mxu0 0.0
        %270 = vmatprep.subr.mxu0 0.0
        %271 = vmatpush1.msra.mxu0 0.0
        %272 = vmatprep.subr.mxu0 0.0
        %273 = vmatpush1.msra.mxu0 0.0
        %274 = vmatprep.subr.mxu0 0.0
        %275 = vmatpush1.msra.mxu0 0.0
        %276 = vmatprep.subr.mxu0 0.0
        %277 = vmatpush1.msra.mxu0 0.0
        %278 = vmatprep.subr.mxu0 0.0
        %279 = vmatpush1.msra.mxu0 0.0
        %280 = vmatprep.subr.mxu0 0.0
        %281 = vmatpush1.msra.mxu0 0.0
        %282 = vmatprep.subr.mxu0 0.0
        %283 = vmatpush1.msra.mxu0 0.0
        %284 = vmatprep.subr.mxu0 0.0
        %285 = vmatpush1.msra.mxu0 0.0
        %286 = vmatprep.subr.mxu0 0.0
        %287 = vmatpush1.msra.mxu0 0.0
        %288 = vmatprep.subr.mxu0 0.0
        %289 = vmatpush1.msra.mxu0 0.0
        %290 = vmatprep.subr.mxu0 0.0
        %291 = vmatpush1.msra.mxu0 0.0
        %292 = vmatprep.subr.mxu0 0.0
        %293 = vmatpush1.msra.mxu0 0.0
        %294 = vmatprep.subr.mxu0 0.0
        %295 = vmatpush1.msra.mxu0 0.0
        %296 = vmatprep.subr.mxu0 0.0
        %297 = vmatpush1.msra.mxu0 0.0
        %298 = vmatprep.subr.mxu0 0.0
        %299 = vmatpush1.msra.mxu0 0.0
        %300 = vmatprep.subr.mxu0 0.0
        %301 = vmatpush1.msra.mxu0 0.0
        %302 = vmatprep.subr.mxu0 0.0
        %303 = vmatpush1.msra.mxu0 0.0
        %304 = vmatprep.subr.mxu0 0.0
        %305 = vmatpush1.msra.mxu0 0.0
        %306 = vmatprep.subr.mxu0 0.0
        %307 = vmatpush1.msra.mxu0 0.0
        %308 = vmatprep.subr.mxu0 0.0
        %309 = vmatpush1.msra.mxu0 0.0
        %310 = vmatprep.mubr.f32.mxu0 0.0
        %311 = vmatmul.mubr.f32.gmra.mrb[0].mxu0 %v199
        %v312 = vpop.f32.mrb[0].mxu0
        %v313 = vadd.f32 %v195, %v312
        %v314 = vpop.f32.mrb[0].mxu0
        %315 = vmatprep.mubr.f32.mxu0 0.0
        %316 = vmatmul.mubr.f32.gmra.mrb[0].mxu0 %v202
        %v317 = vpop.f32.mrb[0].mxu0
        %v318 = vadd.f32 %v195, %v317
        %v319 = vpop.f32.mrb[0].mxu0
        %320 = vmatprep.mubr.f32.mxu0 0.0
        %321 = vmatmul.mubr.f32.gmra.mrb[0].mxu0 %v205
        %v322 = vpop.f32.mrb[0].mxu0
        %v323 = vadd.f32 %v195, %v322
        %v324 = vpop.f32.mrb[0].mxu0
        %325 = vmatprep.mubr.f32.mxu0 0.0
        %326 = vmatmul.mubr.f32.gmra.mrb[0].mxu0 %v208
        %v327 = vpop.f32.mrb[0].mxu0
        %v328 = vadd.f32 %v195, %v327
        %v329 = vpop.f32.mrb[0].mxu0
        %330 = vmatprep.mubr.f32.mxu0 0.0
        %331 = vmatmul.mubr.f32.gmra.mrb[0].mxu0 %v211
        %v332 = vpop.f32.mrb[0].mxu0
        %v333 = vadd.f32 %v195, %v332
        %v334 = vpop.f32.mrb[0].mxu0
        %335 = vmatprep.mubr.f32.mxu0 0.0
        %336 = vmatmul.mubr.f32.gmra.mrb[0].mxu0 %v214
        %v337 = vpop.f32.mrb[0].mxu0
        %v338 = vadd.f32 %v195, %v337
        %v339 = vpop.f32.mrb[0].mxu0
        %340 = vmatprep.mubr.f32.mxu0 0.0
        %341 = vmatmul.mubr.f32.gmra.mrb[0].mxu0 %v217
        %v342 = vpop.f32.mrb[0].mxu0
        %v343 = vadd.f32 %v195, %v342
        %v344 = vpop.f32.mrb[0].mxu0
        %345 = vmatprep.mubr.f32.mxu0 0.0
        %346 = vmatmul.mubr.f32.gmra.mrb[0].mxu0 %v220
        %v347 = vpop.f32.mrb[0].mxu0
        %v348 = vadd.f32 %v195, %v347
        %v349 = vpop.f32.mrb[0].mxu0
        %350 = vmatprep.mubr.f32.mxu0 0.0
        %351 = vmatmul.mubr.f32.gmra.mrb[0].mxu0 %v223
        %v352 = vpop.f32.mrb[0].mxu0
        %v353 = vadd.f32 %v195, %v352
        %v354 = vpop.f32.mrb[0].mxu0
        %355 = vmatprep.mubr.f32.mxu0 0.0
        %356 = vmatmul.mubr.f32.gmra.mrb[0].mxu0 %v226
        %v357 = vpop.f32.mrb[0].mxu0
        %v358 = vadd.f32 %v195, %v357
        %v359 = vpop.f32.mrb[0].mxu0
        %360 = vmatprep.mubr.f32.mxu0 0.0
        %361 = vmatmul.mubr.f32.gmra.mrb[0].mxu0 %v229
        %v362 = vpop.f32.mrb[0].mxu0
        %v363 = vadd.f32 %v195, %v362
        %v364 = vpop.f32.mrb[0].mxu0
        %365 = vmatprep.mubr.f32.mxu0 0.0
        %366 = vmatmul.mubr.f32.gmra.mrb[0].mxu0 %v232
        %v367 = vpop.f32.mrb[0].mxu0
        %v368 = vadd.f32 %v195, %v367
        %v369 = vpop.f32.mrb[0].mxu0
        %370 = vmatprep.mubr.f32.mxu0 0.0
        %371 = vmatmul.mubr.f32.gmra.mrb[0].mxu0 %v235
        %v372 = vpop.f32.mrb[0].mxu0
        %v373 = vadd.f32 %v195, %v372
        %v374 = vpop.f32.mrb[0].mxu0
        %375 = vmatprep.mubr.f32.mxu0 0.0
        %376 = vmatmul.mubr.f32.gmra.mrb[0].mxu0 %v238
        %v377 = vpop.f32.mrb[0].mxu0
        %v378 = vadd.f32 %v195, %v377
        %v379 = vpop.f32.mrb[0].mxu0
        %380 = vmatprep.mubr.f32.mxu0 0.0
        %381 = vmatmul.mubr.f32.gmra.mrb[0].mxu0 %v241
        %v382 = vpop.f32.mrb[0].mxu0
        %v383 = vadd.f32 %v195, %v382
        %v384 = vpop.f32.mrb[0].mxu0
        %385 = vmatprep.mubr.f32.mxu0 0.0
        %386 = vmatmul.mubr.f32.gmra.mrb[0].mxu0 %v244
        %v387 = vpop.f32.mrb[0].mxu0
        %v388 = vadd.f32 %v195, %v387
        %v389 = vpop.f32.mrb[0].mxu0
        %390 = vdwg.mxu0
        %vm391 = vcmask 23552
        %v392 = vsel %vm391, %v313, -inf
        %393 = vmax.xlane.f32.xlu0 %v392
        %v394 = vpop.xlane.xlu0 %393
        %v395 = vsel %vm391, %v318, -inf
        %396 = vmax.xlane.f32.xlu0 %v395
        %v397 = vpop.xlane.xlu0 %396
        %v398 = vsel %vm391, %v323, -inf
        %399 = vmax.xlane.f32.xlu0 %v398
        %v400 = vpop.xlane.xlu0 %399
        %v401 = vsel %vm391, %v328, -inf
        %402 = vmax.xlane.f32.xlu0 %v401
        %v403 = vpop.xlane.xlu0 %402
        %v404 = vsel %vm391, %v333, -inf
        %405 = vmax.xlane.f32.xlu0 %v404
        %v406 = vpop.xlane.xlu0 %405
        %v407 = vsel %vm391, %v338, -inf
        %408 = vmax.xlane.f32.xlu0 %v407
        %v409 = vpop.xlane.xlu0 %408
        %v410 = vsel %vm391, %v343, -inf
        %411 = vmax.xlane.f32.xlu0 %v410
        %v412 = vpop.xlane.xlu0 %411
        %v413 = vsel %vm391, %v348, -inf
        %414 = vmax.xlane.f32.xlu0 %v413
        %v415 = vpop.xlane.xlu0 %414
        %v416 = vsel %vm391, %v353, -inf
        %417 = vmax.xlane.f32.xlu0 %v416
        %v418 = vpop.xlane.xlu0 %417
        %v419 = vsel %vm391, %v358, -inf
        %420 = vmax.xlane.f32.xlu0 %v419
        %v421 = vpop.xlane.xlu0 %420
        %v422 = vsel %vm391, %v363, -inf
        %423 = vmax.xlane.f32.xlu0 %v422
        %v424 = vpop.xlane.xlu0 %423
        %v425 = vsel %vm391, %v368, -inf
        %426 = vmax.xlane.f32.xlu0 %v425
        %v427 = vpop.xlane.xlu0 %426
        %v428 = vsel %vm391, %v373, -inf
        %429 = vmax.xlane.f32.xlu0 %v428
        %v430 = vpop.xlane.xlu0 %429
        %v431 = vsel %vm391, %v378, -inf
        %432 = vmax.xlane.f32.xlu0 %v431
        %v433 = vpop.xlane.xlu0 %432
        %v434 = vsel %vm391, %v383, -inf
        %435 = vmax.xlane.f32.xlu0 %v434
        %v436 = vpop.xlane.xlu0 %435
        %v437 = vsel %vm391, %v388, -inf
        %438 = vmax.xlane.f32.xlu0 %v437
        %v439 = vpop.xlane.xlu0 %438
        %vm440 = vcmp.eq.f32.partialorder %v394, -inf
        %vm441 = vcmp.eq.f32.partialorder %v397, -inf
        %vm442 = vcmp.eq.f32.partialorder %v400, -inf
        %vm443 = vcmp.eq.f32.partialorder %v403, -inf
        %vm444 = vcmp.eq.f32.partialorder %v406, -inf
        %vm445 = vcmp.eq.f32.partialorder %v409, -inf
        %vm446 = vcmp.eq.f32.partialorder %v412, -inf
        %vm447 = vcmp.eq.f32.partialorder %v415, -inf
        %vm448 = vcmp.eq.f32.partialorder %v418, -inf
        %vm449 = vcmp.eq.f32.partialorder %v421, -inf
        %vm450 = vcmp.eq.f32.partialorder %v424, -inf
        %vm451 = vcmp.eq.f32.partialorder %v427, -inf
        %vm452 = vcmp.eq.f32.partialorder %v430, -inf
        %vm453 = vcmp.eq.f32.partialorder %v433, -inf
        %vm454 = vcmp.eq.f32.partialorder %v436, -inf
        %vm455 = vcmp.eq.f32.partialorder %v439, -inf
        %v456 = vsel %vm440, 0.0, %v394
        %v457 = vsel %vm441, 0.0, %v397
        %v458 = vsel %vm442, 0.0, %v400
        %v459 = vsel %vm443, 0.0, %v403
        %v460 = vsel %vm444, 0.0, %v406
        %v461 = vsel %vm445, 0.0, %v409
        %v462 = vsel %vm446, 0.0, %v412
        %v463 = vsel %vm447, 0.0, %v415
        %v464 = vsel %vm448, 0.0, %v418
        %v465 = vsel %vm449, 0.0, %v421
        %v466 = vsel %vm450, 0.0, %v424
        %v467 = vsel %vm451, 0.0, %v427
        %v468 = vsel %vm452, 0.0, %v430
        %v469 = vsel %vm453, 0.0, %v433
        %v470 = vsel %vm454, 0.0, %v436
        %v471 = vsel %vm455, 0.0, %v439
        %v472 = vsub.f32 %v313, %v456
        %v473 = vsub.f32 %v318, %v457
        %v474 = vsub.f32 %v323, %v458
        %v475 = vsub.f32 %v328, %v459
        %v476 = vsub.f32 %v333, %v460
        %v477 = vsub.f32 %v338, %v461
        %v478 = vsub.f32 %v343, %v462
        %v479 = vsub.f32 %v348, %v463
        %v480 = vsub.f32 %v353, %v464
        %v481 = vsub.f32 %v358, %v465
        %v482 = vsub.f32 %v363, %v466
        %v483 = vsub.f32 %v368, %v467
        %v484 = vsub.f32 %v373, %v468
        %v485 = vsub.f32 %v378, %v469
        %v486 = vsub.f32 %v383, %v470
        %v487 = vsub.f32 %v388, %v471
        %v488 = vmul.f32 %v472, 1.442695
        %v489 = vpow.pop %v488
        %v490 = vmul.f32 %v473, 1.442695
        %v491 = vpow.pop %v490
        %v492 = vmul.f32 %v474, 1.442695
        %v493 = vpow.pop %v492
        %v494 = vmul.f32 %v475, 1.442695
        %v495 = vpow.pop %v494
        %v496 = vmul.f32 %v476, 1.442695
        %v497 = vpow.pop %v496
        %v498 = vmul.f32 %v477, 1.442695
        %v499 = vpow.pop %v498
        %v500 = vmul.f32 %v478, 1.442695
        %v501 = vpow.pop %v500
        %v502 = vmul.f32 %v479, 1.442695
        %v503 = vpow.pop %v502
        %v504 = vmul.f32 %v480, 1.442695
        %v505 = vpow.pop %v504
        %v506 = vmul.f32 %v481, 1.442695
        %v507 = vpow.pop %v506
        %v508 = vmul.f32 %v482, 1.442695
        %v509 = vpow.pop %v508
        %v510 = vmul.f32 %v483, 1.442695
        %v511 = vpow.pop %v510
        %v512 = vmul.f32 %v484, 1.442695
        %v513 = vpow.pop %v512
        %v514 = vmul.f32 %v485, 1.442695
        %v515 = vpow.pop %v514
        %v516 = vmul.f32 %v486, 1.442695
        %v517 = vpow.pop %v516
        %v518 = vmul.f32 %v487, 1.442695
        %v519 = vpow.pop %v518
        %v520 = vsel %vm391, %v489, 0.0
        %521 = vadd.xlane.f32.xlu0 %v520
        %v522 = vpop.xlane.xlu0 %521
        %v523 = vsel %vm391, %v491, 0.0
        %524 = vadd.xlane.f32.xlu0 %v523
        %v525 = vpop.xlane.xlu0 %524
        %v526 = vsel %vm391, %v493, 0.0
        %527 = vadd.xlane.f32.xlu0 %v526
        %v528 = vpop.xlane.xlu0 %527
        %v529 = vsel %vm391, %v495, 0.0
        %530 = vadd.xlane.f32.xlu0 %v529
        %v531 = vpop.xlane.xlu0 %530
        %v532 = vsel %vm391, %v497, 0.0
        %533 = vadd.xlane.f32.xlu0 %v532
        %v534 = vpop.xlane.xlu0 %533
        %v535 = vsel %vm391, %v499, 0.0
        %536 = vadd.xlane.f32.xlu0 %v535
        %v537 = vpop.xlane.xlu0 %536
        %v538 = vsel %vm391, %v501, 0.0
        %539 = vadd.xlane.f32.xlu0 %v538
        %v540 = vpop.xlane.xlu0 %539
        %v541 = vsel %vm391, %v503, 0.0
        %542 = vadd.xlane.f32.xlu0 %v541
        %v543 = vpop.xlane.xlu0 %542
        %v544 = vsel %vm391, %v505, 0.0
        %545 = vadd.xlane.f32.xlu0 %v544
        %v546 = vpop.xlane.xlu0 %545
        %v547 = vsel %vm391, %v507, 0.0
        %548 = vadd.xlane.f32.xlu0 %v547
        %v549 = vpop.xlane.xlu0 %548
        %v550 = vsel %vm391, %v509, 0.0
        %551 = vadd.xlane.f32.xlu0 %v550
        %v552 = vpop.xlane.xlu0 %551
        %v553 = vsel %vm391, %v511, 0.0
        %554 = vadd.xlane.f32.xlu0 %v553
        %v555 = vpop.xlane.xlu0 %554
        %v556 = vsel %vm391, %v513, 0.0
        %557 = vadd.xlane.f32.xlu0 %v556
        %v558 = vpop.xlane.xlu0 %557
        %v559 = vsel %vm391, %v515, 0.0
        %560 = vadd.xlane.f32.xlu0 %v559
        %v561 = vpop.xlane.xlu0 %560
        %v562 = vsel %vm391, %v517, 0.0
        %563 = vadd.xlane.f32.xlu0 %v562
        %v564 = vpop.xlane.xlu0 %563
        %v565 = vsel %vm391, %v519, 0.0
        %566 = vadd.xlane.f32.xlu0 %v565
        %v567 = vpop.xlane.xlu0 %566
        %v568 = vlog2.pop %v522
        %v569 = vmul.f32 %v568, 0.6931472
        %v570 = vlog2.pop %v525
        %v571 = vmul.f32 %v570, 0.6931472
        %v572 = vlog2.pop %v528
        %v573 = vmul.f32 %v572, 0.6931472
        %v574 = vlog2.pop %v531
        %v575 = vmul.f32 %v574, 0.6931472
        %v576 = vlog2.pop %v534
        %v577 = vmul.f32 %v576, 0.6931472
        %v578 = vlog2.pop %v537
        %v579 = vmul.f32 %v578, 0.6931472
        %v580 = vlog2.pop %v540
        %v581 = vmul.f32 %v580, 0.6931472
        %v582 = vlog2.pop %v543
        %v583 = vmul.f32 %v582, 0.6931472
        %v584 = vlog2.pop %v546
        %v585 = vmul.f32 %v584, 0.6931472
        %v586 = vlog2.pop %v549
        %v587 = vmul.f32 %v586, 0.6931472
        %v588 = vlog2.pop %v552
        %v589 = vmul.f32 %v588, 0.6931472
        %v590 = vlog2.pop %v555
        %v591 = vmul.f32 %v590, 0.6931472
        %v592 = vlog2.pop %v558
        %v593 = vmul.f32 %v592, 0.6931472
        %v594 = vlog2.pop %v561
        %v595 = vmul.f32 %v594, 0.6931472
        %v596 = vlog2.pop %v564
        %v597 = vmul.f32 %v596, 0.6931472
        %v598 = vlog2.pop %v567
        %v599 = vmul.f32 %v598, 0.6931472
        %v600 = vadd.f32 %v456, %v569
        %v601 = vadd.f32 %v457, %v571
        %v602 = vadd.f32 %v458, %v573
        %v603 = vadd.f32 %v459, %v575
        %v604 = vadd.f32 %v460, %v577
        %v605 = vadd.f32 %v461, %v579
        %v606 = vadd.f32 %v462, %v581
        %v607 = vadd.f32 %v463, %v583
        %v608 = vadd.f32 %v464, %v585
        %v609 = vadd.f32 %v465, %v587
        %v610 = vadd.f32 %v466, %v589
        %v611 = vadd.f32 %v467, %v591
        %v612 = vadd.f32 %v468, %v593
        %v613 = vadd.f32 %v469, %v595
        %v614 = vadd.f32 %v470, %v597
        %v615 = vadd.f32 %v471, %v599
        %v632 = vlaneseq
        %v633 = vand.u32 %v632, 127
        %v634 = vlaneseq
        %v635 = vshrl.u32 %v634, 7
        %v636 = vsub.s32 %v633, %v635
        %v637 = vrot.slane %v600, %v636
        %v638 = vadd.s32 %v633, 4294967288
        %v639 = vlaneseq
        %v640 = vshrl.u32 %v639, 7
        %v641 = vsub.s32 %v638, %v640
        %v642 = vrot.slane %v601, %v641
        %vm643 = vcmask 130112
        %v644 = vsel %vm643, %v642, %v637
        %v645 = vadd.s32 %v633, 4294967280
        %v646 = vlaneseq
        %v647 = vshrl.u32 %v646, 7
        %v648 = vsub.s32 %v645, %v647
        %v649 = vrot.slane %v602, %v648
        %vm650 = vcmask 195712
        %v651 = vsel %vm650, %v649, %v644
        %v652 = vadd.s32 %v633, 4294967272
        %v653 = vlaneseq
        %v654 = vshrl.u32 %v653, 7
        %v655 = vsub.s32 %v652, %v654
        %v656 = vrot.slane %v603, %v655
        %vm657 = vcmask 261312
        %v658 = vsel %vm657, %v656, %v651
        %v659 = vadd.s32 %v633, 4294967264
        %v660 = vlaneseq
        %v661 = vshrl.u32 %v660, 7
        %v662 = vsub.s32 %v659, %v661
        %v663 = vrot.slane %v604, %v662
        %vm664 = vcmask 326912
        %v665 = vsel %vm664, %v663, %v658
        %v666 = vadd.s32 %v633, 4294967256
        %v667 = vlaneseq
        %v668 = vshrl.u32 %v667, 7
        %v669 = vsub.s32 %v666, %v668
        %v670 = vrot.slane %v605, %v669
        %vm671 = vcmask 392512
        %v672 = vsel %vm671, %v670, %v665
        %v673 = vadd.s32 %v633, 4294967248
        %v674 = vlaneseq
        %v675 = vshrl.u32 %v674, 7
        %v676 = vsub.s32 %v673, %v675
        %v677 = vrot.slane %v606, %v676
        %vm678 = vcmask 458112
        %v679 = vsel %vm678, %v677, %v672
        %v680 = vadd.s32 %v633, 4294967240
        %v681 = vlaneseq
        %v682 = vshrl.u32 %v681, 7
        %v683 = vsub.s32 %v680, %v682
        %v684 = vrot.slane %v607, %v683
        %vm685 = vcmask 523712
        %v686 = vsel %vm685, %v684, %v679
        %v687 = vadd.s32 %v633, 4294967232
        %v688 = vlaneseq
        %v689 = vshrl.u32 %v688, 7
        %v690 = vsub.s32 %v687, %v689
        %v691 = vrot.slane %v608, %v690
        %vm692 = vcmask 589312
        %v693 = vsel %vm692, %v691, %v686
        %v694 = vadd.s32 %v633, 4294967224
        %v695 = vlaneseq
        %v696 = vshrl.u32 %v695, 7
        %v697 = vsub.s32 %v694, %v696
        %v698 = vrot.slane %v609, %v697
        %vm699 = vcmask 654912
        %v700 = vsel %vm699, %v698, %v693
        %v701 = vadd.s32 %v633, 4294967216
        %v702 = vlaneseq
        %v703 = vshrl.u32 %v702, 7
        %v704 = vsub.s32 %v701, %v703
        %v705 = vrot.slane %v610, %v704
        %vm706 = vcmask 720512
        %v707 = vsel %vm706, %v705, %v700
        %v708 = vadd.s32 %v633, 4294967208
        %v709 = vlaneseq
        %v710 = vshrl.u32 %v709, 7
        %v711 = vsub.s32 %v708, %v710
        %v712 = vrot.slane %v611, %v711
        %vm713 = vcmask 786112
        %v714 = vsel %vm713, %v712, %v707
        %v715 = vadd.s32 %v633, 4294967200
        %v716 = vlaneseq
        %v717 = vshrl.u32 %v716, 7
        %v718 = vsub.s32 %v715, %v717
        %v719 = vrot.slane %v612, %v718
        %vm720 = vcmask 851712
        %v721 = vsel %vm720, %v719, %v714
        %v722 = vadd.s32 %v633, 4294967192
        %v723 = vlaneseq
        %v724 = vshrl.u32 %v723, 7
        %v725 = vsub.s32 %v722, %v724
        %v726 = vrot.slane %v613, %v725
        %vm727 = vcmask 917312
        %v728 = vsel %vm727, %v726, %v721
        %v729 = vadd.s32 %v633, 4294967184
        %v730 = vlaneseq
        %v731 = vshrl.u32 %v730, 7
        %v732 = vsub.s32 %v729, %v731
        %v733 = vrot.slane %v614, %v732
        %vm734 = vcmask 982912
        %v735 = vsel %vm734, %v733, %v728
        %v736 = vadd.s32 %v633, 4294967176
        %v737 = vlaneseq
        %v738 = vshrl.u32 %v737, 7
        %v739 = vsub.s32 %v736, %v738
        %v740 = vrot.slane %v615, %v739
        %vm741 = vcmask 1048512
        %v742 = vsel %vm741, %v740, %v735
        %744 = vst [vmem:[%s163] sm:$0x1] %v742
        %s745 = sand.u32 %s93, 1
        %s746 = scalar_lea.sflag [#allocation3], %s745
        %s747 = sand.u32 %s93, 1
        %s748 = scalar_lea.vmem [#allocation2], %s747
        // Predicated region
        $region33: #{tpu_custom_call.1} parent=31 // pred_check
          %p749 = pneg %p103
        $region34: #{tpu_custom_call.1} parent=31 // pred_check_branch
          %751 = sbr.rel (%p749) target = $region36
        $region35: #{tpu_custom_call.1} parent=31 // pred_region
          %s753 = ssub.s32 16, 16
          %754 = vsyncadd %s746, %s753
          %s755 = smul.addr %s17, 16
          %s756 = scalar_lea.hbm %s3, %s755
          %s758 = sshll.u32 %s748, 4
          %s759 = int_to_ptr.vmem [resolvable:$true] %s758
          %761 = dma.vmem_to_hbm [thread:$0]  %s759, 16, %s756, %s746
        $region36: #{tpu_custom_call.1} parent=31 // pred_fallthru
          _
      $region32: #{tpu_custom_call.1} parent=5 // pred_fallthru
        _
      %p762 = scmp.le.s32.totalorder 2, %s12
      // Predicated region
      $region37: #{tpu_custom_call.1} parent=5 // pred_check
        %p763 = pneg %p762
      $region38: #{tpu_custom_call.1} parent=5 // pred_check_branch
        %765 = sbr.rel (%p763) target = $region40
      $region39: #{tpu_custom_call.1} parent=5 // pred_region
        %s766 = ssub.s32 %s12, 2
        // Predicated region
        $region41: #{tpu_custom_call.1} parent=39 // pred_check
          %p767 = pneg %p109
        $region42: #{tpu_custom_call.1} parent=39 // pred_check_branch
          %769 = sbr.rel (%p767) target = $region44
        $region43: #{tpu_custom_call.1} parent=39 // pred_region
          %s770 = sand.u32 %s94, 1
          %s771 = scalar_lea.sflag [#allocation3], %s770
          %s772 = sand.u32 %s94, 1
          %s773 = scalar_lea.vmem [#allocation2], %s772
          %774 = dma.done %s771, 16
        $region44: #{tpu_custom_call.1} parent=39 // pred_fallthru
          _
      $region40: #{tpu_custom_call.1} parent=5 // pred_fallthru
        _
    $region6: #{tpu_custom_call.1} parent=1 // loop_footer
      %s16 = sadd.s32 1, %s12
    $region7: #{tpu_custom_call.1} parent=1 // loop_footer_branch
      %11 = sbr.rel target = $region3
    $region8: #{tpu_custom_call.1} parent=1 // loop_exit
      _
    %775 = vsyncpa [#allocation3], 1
    %s776 = scalar_lea.sflag [#allocation3], 1
    %777 = vsyncpa %s776, 1

</llo_original>
